<compile_context>
chip_gen: v7x
topology: tpu7x:2x2x1
jax: 0.10.0
libtpu: 0.0.40
codegen_flags: <defaults>
</compile_context>

<pallas_src>
import numpy as np
import jax
import jax.numpy as jnp
from jax.experimental import pallas as pl
from jax.experimental.pallas import tpu as pltpu

# ----- hyper-parameters implied by DeterministicCriticNet.__init__ -----
FEATURES = 4                     # task.state_dim[0]
T        = 8                     # state_dim[1] (time window)
N_ASSETS = 7                     # state_dim[2]
A_DIM    = N_ASSETS + 1          # action_dim (cash + assets)
H0, H2, H1 = 8, 16, 16
STRIDE_T = T - 1 - 2             # conv2 kernel height / stride = 5
HT  = T - 1                      # time extent after dropping first step = 7
HT2 = HT - 2                     # time extent after conv1 (3,1) valid = 5
HP  = HT + 2                     # zero-padded time extent for conv0 = 9
B   = 2

LANES = 128                      # common lane width for all P matrices
ROWS  = B * N_ASSETS             # matmul M dimension (batch folded in) = 14

# xin column layout:  k = tin*(3*FEATURES) + dw*FEATURES + c   for the 3x3 im2col
COL_IM2COL = HP * 3 * FEATURES   # 108 data columns
COL_BIAS   = COL_IM2COL          # 108: constant-1 bias carrier
COL_W0     = COL_BIAS + 1        # 109: w0[b, a]      carrier
COL_ACT    = COL_W0 + 1          # 110: action[b, a]  carrier

# intermediate column layouts (carriers appended after the conv channels)
P0_BIAS, P0_W0, P0_ACT = HT * H0, HT * H0 + 1, HT * H0 + 2        # 56, 57, 58
P1_BIAS, P1_W0, P1_ACT = HT2 * H2, HT2 * H2 + 1, HT2 * H2 + 2     # 80, 81, 82
P2_W0, P2_ACT, P2_ONE  = H1, H1 + 1, H1 + 2                       # 16, 17, 18

TAIL_ROWS = 16                   # B*N_ASSETS rows padded to a multiple of 8
SLAB_ROWS = 3 * LANES + TAIL_ROWS  # 400


def critic_kernel(xin_ref, w_ref, o_ref):
    # xin_ref : (ROWS, 128)  per-call activations (im2col + carrier columns)
    # w_ref   : (400, 128)   packed parameter slab (see prepare_critic_params)
    # o_ref   : (B, 1)       Q(s, a)
    x = xin_ref[...]

    # conv0 (3x3, pad 1) + relu  — one matmul against the block-banded slab block
    p0 = jnp.maximum(jnp.dot(x, w_ref[0:LANES, :],
                             preferred_element_type=jnp.float32), 0.0)
    # conv1 ((3,1) valid) + relu
    p1 = jnp.maximum(jnp.dot(p0, w_ref[LANES:2 * LANES, :],
                             preferred_element_type=jnp.float32), 0.0)
    # conv2 ((stride_time,1), stride) — no relu here (relu comes with the concat h)
    p2 = jnp.dot(p1, w_ref[2 * LANES:3 * LANES, :],
                 preferred_element_type=jnp.float32)

    # h = relu(cat([phi2, w0, action], C)); layer3 weights (+ bias) are laid out
    # per-row in the slab tail, so the Linear is an elementwise mul + reductions.
    tail = w_ref[3 * LANES:3 * LANES + ROWS, :]          # (ROWS, 128)
    g = jnp.maximum(p2, 0.0) * tail                      # (ROWS, 128)

    # per-batch reduction of the ROWS axis via a tiny block-indicator matmul
    rows = jax.lax.broadcasted_iota(jnp.int32, (B, ROWS), 1)
    bidx = jax.lax.broadcasted_iota(jnp.int32, (B, ROWS), 0)
    sel = jnp.logical_and(rows >= bidx * N_ASSETS,
                          rows < (bidx + 1) * N_ASSETS).astype(jnp.float32)
    bsum = jnp.dot(sel, g, preferred_element_type=jnp.float32)   # (B, 128)
    o_ref[...] = jnp.sum(bsum, axis=1, keepdims=True)            # (B, 1)


def _critic_pallas(xin, wslab):
    return pl.pallas_call(
        critic_kernel,
        out_shape=jax.ShapeDtypeStruct((B, 1), jnp.float32),
        grid_spec=pltpu.PrefetchScalarGridSpec(
            num_scalar_prefetch=0,
            grid=(1,),                       # single invocation: batch folded into M
            in_specs=[
                pl.BlockSpec((ROWS, LANES), lambda i: (0, 0)),
                pl.BlockSpec((SLAB_ROWS, LANES), lambda i: (0, 0)),
            ],
            out_specs=pl.BlockSpec((B, 1), lambda i: (0, 0)),
        ),
        # single grid step; if a batch grid were reintroduced for large B it
        # should be marked "parallel" (2 TensorCores on v7x).
        compiler_params=pltpu.CompilerParams(dimension_semantics=("arbitrary",)),
    )(xin, wslab)


@jax.jit
def critic_forward_pallas(x, action, wslab):
    """x: (B, FEATURES, T, N_ASSETS) NCHW; action: (B, A_DIM); wslab: prepared params."""
    x = x.astype(jnp.float32)
    action = action.astype(jnp.float32)

    # per-call activation prep: channels-last + conv0 im2col, done once per call
    xd = x[:, :, 1:, :]                                   # (B, C, HT, A)
    xt = jnp.transpose(xd, (0, 3, 2, 1))                  # (B, A, HT, C)
    xpt = jnp.pad(xt, ((0, 0), (1, 1), (1, 1), (0, 0)))   # (B, A+2, HP, C)
    taps = jnp.stack([xpt[:, dw:dw + N_ASSETS] for dw in range(3)],
                     axis=3)                              # (B, A, HP, 3, C)
    xcol = taps.reshape(ROWS, COL_IM2COL)                 # (14, 108)

    ones = jnp.ones((ROWS, 1), jnp.float32)               # bias carrier
    w0col = x[:, 0, 0, :].reshape(ROWS, 1)                # w0 = x[:, :1, :1, :]
    actcol = action[:, :N_ASSETS].reshape(ROWS, 1)        # action[:, :-1]
    pad = jnp.zeros((ROWS, LANES - (COL_IM2COL + 3)), jnp.float32)
    xin = jnp.concatenate([xcol, ones, w0col, actcol, pad], axis=1)   # (14, 128)

    return _critic_pallas(xin, wslab)


def prepare_critic_params(p, batch=B):
    """One-time host-side relayout of the PyTorch-style params into the packed slab."""
    c0w = np.asarray(p['c0w'], np.float32); c0b = np.asarray(p['c0b'], np.float32)
    c1w = np.asarray(p['c1w'], np.float32); c1b = np.asarray(p['c1b'], np.float32)
    c2w = np.asarray(p['c2w'], np.float32); c2b = np.asarray(p['c2b'], np.float32)
    lw = np.asarray(p['lw'], np.float32).reshape(-1)      # ((H1+2)*A,)
    lb = float(np.asarray(p['lb'], np.float32).reshape(()))

    KC = 3 * FEATURES
    # ---- block 0: conv0 as block-banded matrix, bias + carriers appended
    w0s = np.zeros((LANES, LANES), np.float32)
    for tout in range(HT):
        for dh in range(3):
            tin = tout + dh
            for dw in range(3):
                for c in range(FEATURES):
                    k = tin * KC + dw * FEATURES + c
                    w0s[k, tout * H0:(tout + 1) * H0] = c0w[:, c, dh, dw]
        w0s[COL_BIAS, tout * H0:(tout + 1) * H0] = c0b
    w0s[COL_BIAS, P0_BIAS] = 1.0
    w0s[COL_W0, P0_W0] = 1.0
    w0s[COL_ACT, P0_ACT] = 1.0

    # ---- block 1: conv1 ((3,1) valid)
    w1s = np.zeros((LANES, LANES), np.float32)
    for t1 in range(HT2):
        for dh in range(3):
            t0 = t1 + dh
            for c0 in range(H0):
                w1s[t0 * H0 + c0, t1 * H2:(t1 + 1) * H2] = c1w[:, c0, dh, 0]
        w1s[P0_BIAS, t1 * H2:(t1 + 1) * H2] = c1b
    w1s[P0_BIAS, P1_BIAS] = 1.0
    w1s[P0_W0, P1_W0] = 1.0
    w1s[P0_ACT, P1_ACT] = 1.0

    # ---- block 2: conv2 ((stride_time,1), stride) + carriers for the h-concat
    w2s = np.zeros((LANES, LANES), np.float32)
    for t in range(STRIDE_T):
        for c1 in range(H2):
            w2s[t * H2 + c1, 0:H1] = c2w[:, c1, t, 0]
    w2s[P1_BIAS, 0:H1] = c2b
    w2s[P1_BIAS, P2_ONE] = 1.0        # constant-1 column carrying the Linear bias
    w2s[P1_W0, P2_W0] = 1.0           # relu(w0)     -> P2 col 16
    w2s[P1_ACT, P2_ACT] = 1.0         # relu(action) -> P2 col 17

    # ---- tail: per-row layer3 weights (flatten order of h.view is c*assets + a)
    tail = np.zeros((TAIL_ROWS, LANES), np.float32)
    for b in range(batch):
        for a in range(N_ASSETS):
            r = b * N_ASSETS + a
            for c2 in range(H1):
                tail[r, c2] = lw[c2 * N_ASSETS + a]
            tail[r, P2_W0] = lw[H1 * N_ASSETS + a]
            tail[r, P2_ACT] = lw[(H1 + 1) * N_ASSETS + a]
            if a == 0:
                tail[r, P2_ONE] = lb          # linear bias, added once per batch row group

    slab = np.concatenate([w0s, w1s, w2s, tail], axis=0)  # (400, 128)
    return jnp.asarray(slab)


# ---------------- pure-JAX reference (mirrors the PyTorch forward) -------------
def _conv2d_nchw(x, w, b, stride, padding):
    out = jax.lax.conv_general_dilated(
        x, w, window_strides=stride, padding=padding,
        dimension_numbers=('NCHW', 'OIHW', 'NCHW'))
    return out + b.reshape(1, -1, 1, 1)


def ref_forward(x, action, p):
    act = action[:, None, None, :-1]
    w0 = x[:, :1, :1, :]
    xs = x[:, :, 1:, :]
    phi0 = jax.nn.relu(_conv2d_nchw(xs, p['c0w'], p['c0b'], (1, 1), ((1, 1), (1, 1))))
    phi1 = jax.nn.relu(_conv2d_nchw(phi0, p['c1w'], p['c1b'], (1, 1), ((0, 0), (0, 0))))
    phi2 = _conv2d_nchw(phi1, p['c2w'], p['c2b'], (STRIDE_T, 1), ((0, 0), (0, 0)))
    h = jax.nn.relu(jnp.concatenate([phi2, w0, act], axis=1))
    h = h.reshape(h.shape[0], -1)
    return h @ p['lw'].T + p['lb']


def init_params(key):
    ks = jax.random.split(key, 8)
    s = 0.2
    return {
        'c0w': s * jax.random.normal(ks[0], (H0, FEATURES, 3, 3), jnp.float32),
        'c0b': s * jax.random.normal(ks[1], (H0,), jnp.float32),
        'c1w': s * jax.random.normal(ks[2], (H2, H0, 3, 1), jnp.float32),
        'c1b': s * jax.random.normal(ks[3], (H2,), jnp.float32),
        'c2w': s * jax.random.normal(ks[4], (H1, H2, STRIDE_T, 1), jnp.float32),
        'c2b': s * jax.random.normal(ks[5], (H1,), jnp.float32),
        # layer3.weight.data.uniform_(0, 0.01) as in the PyTorch module
        'lw':  0.01 * jax.random.uniform(ks[6], (1, (H1 + 2) * N_ASSETS), jnp.float32),
        'lb':  0.1 * jax.random.normal(ks[7], (1,), jnp.float32),
    }
    # TODO(synk): batch_norm=True branch (BatchNorm2d) not implemented; default False path only.


if __name__ == "__main__":
    key = jax.random.PRNGKey(0)
    kx, ka, kp = jax.random.split(key, 3)
    x = jax.random.normal(kx, (B, FEATURES, T, N_ASSETS), jnp.float32)
    action = jnp.tanh(jax.random.normal(ka, (B, A_DIM), jnp.float32))
    params = init_params(kp)

    wslab = prepare_critic_params(params)       # one-time weight relayout (not per call)
    y = critic_forward_pallas(x, action, wslab)
    jax.block_until_ready(y)

    y_ref = ref_forward(x, action, params)
    np.testing.assert_allclose(np.asarray(y), np.asarray(y_ref), rtol=1e-4, atol=1e-4)
    print("KERNEL_OK")
</pallas_src>

<mosaic_0001>
module attributes {stable_mosaic.version = 11 : i64} {
  func.func @critic_kernel(%arg0: i32, %arg1: memref<14x128xf32, #tpu.memory_space<vmem>>, %arg2: memref<400x128xf32, #tpu.memory_space<vmem>>, %arg3: memref<2x1xf32, #tpu.memory_space<vmem>>) attributes {dimension_semantics = [#tpu.dimension_semantics<arbitrary>], iteration_bounds = array<i64: 1>, scalar_prefetch = 0 : i64, scratch_operands = 0 : i64, tpu.core_type = #tpu.core_type<tc>, window_params = [{pipeline_mode = #tpu.pipeline_mode<synchronous>, transform_indices = @transform_0, window_bounds = array<i64: 14, 128>}, {pipeline_mode = #tpu.pipeline_mode<synchronous>, transform_indices = @transform_1, window_bounds = array<i64: 400, 128>}, {pipeline_mode = #tpu.pipeline_mode<synchronous>, transform_indices = @transform_2, window_bounds = array<i64: 2, 1>}]} {
    %c0 = arith.constant 0 : index
    %c0_0 = arith.constant 0 : index
    %0 = vector.load %arg1[%c0, %c0_0] : memref<14x128xf32, #tpu.memory_space<vmem>>, vector<14x128xf32>
    %c0_1 = arith.constant 0 : index
    %c0_2 = arith.constant 0 : index
    %1 = vector.load %arg2[%c0_1, %c0_2] : memref<400x128xf32, #tpu.memory_space<vmem>>, vector<128x128xf32>
    %cst = arith.constant dense<0.000000e+00> : vector<14x128xf32>
    %2 = tpu.matmul %0, %1, %cst {dimension_numbers = #tpu.dot_dimension_numbers<[1], [0], [0], [1], [0, 0, 1, 1], [], []>} : vector<14x128xf32>, vector<128x128xf32>, vector<14x128xf32> -> vector<14x128xf32>
    %cst_3 = arith.constant 0.000000e+00 : f32
    %3 = vector.broadcast %cst_3 : f32 to vector<14x128xf32>
    %4 = arith.maximumf %2, %3 : vector<14x128xf32>
    %c128 = arith.constant 128 : index
    %c0_4 = arith.constant 0 : index
    %5 = vector.load %arg2[%c128, %c0_4] : memref<400x128xf32, #tpu.memory_space<vmem>>, vector<128x128xf32>
    %cst_5 = arith.constant dense<0.000000e+00> : vector<14x128xf32>
    %6 = tpu.matmul %4, %5, %cst_5 {dimension_numbers = #tpu.dot_dimension_numbers<[1], [0], [0], [1], [0, 0, 1, 1], [], []>} : vector<14x128xf32>, vector<128x128xf32>, vector<14x128xf32> -> vector<14x128xf32>
    %cst_6 = arith.constant 0.000000e+00 : f32
    %7 = vector.broadcast %cst_6 : f32 to vector<14x128xf32>
    %8 = arith.maximumf %6, %7 : vector<14x128xf32>
    %c256 = arith.constant 256 : index
    %c0_7 = arith.constant 0 : index
    %9 = vector.load %arg2[%c256, %c0_7] : memref<400x128xf32, #tpu.memory_space<vmem>>, vector<128x128xf32>
    %cst_8 = arith.constant dense<0.000000e+00> : vector<14x128xf32>
    %10 = tpu.matmul %8, %9, %cst_8 {dimension_numbers = #tpu.dot_dimension_numbers<[1], [0], [0], [1], [0, 0, 1, 1], [], []>} : vector<14x128xf32>, vector<128x128xf32>, vector<14x128xf32> -> vector<14x128xf32>
    %c384 = arith.constant 384 : index
    %c0_9 = arith.constant 0 : index
    %11 = vector.load %arg2[%c384, %c0_9] : memref<400x128xf32, #tpu.memory_space<vmem>>, vector<14x128xf32>
    %cst_10 = arith.constant 0.000000e+00 : f32
    %12 = vector.broadcast %cst_10 : f32 to vector<14x128xf32>
    %13 = arith.maximumf %10, %12 : vector<14x128xf32>
    %14 = arith.mulf %13, %11 : vector<14x128xf32>
    %15 = tpu.iota {dimensions = array<i32: 1>} : vector<2x14xi32>
    %16 = tpu.iota {dimensions = array<i32: 0>} : vector<2x14xi32>
    %c7_i32 = arith.constant 7 : i32
    %17 = vector.broadcast %c7_i32 : i32 to vector<2x14xi32>
    %18 = arith.muli %16, %17 : vector<2x14xi32>
    %19 = arith.cmpi sge, %15, %18 : vector<2x14xi32>
    %c1_i32 = arith.constant 1 : i32
    %20 = vector.broadcast %c1_i32 : i32 to vector<2x14xi32>
    %21 = arith.addi %16, %20 : vector<2x14xi32>
    %c7_i32_11 = arith.constant 7 : i32
    %22 = vector.broadcast %c7_i32_11 : i32 to vector<2x14xi32>
    %23 = arith.muli %21, %22 : vector<2x14xi32>
    %24 = arith.cmpi slt, %15, %23 : vector<2x14xi32>
    %25 = arith.andi %19, %24 : vector<2x14xi1>
    %26 = arith.extui %25 : vector<2x14xi1> to vector<2x14xi32>
    %27 = arith.sitofp %26 : vector<2x14xi32> to vector<2x14xf32>
    %cst_12 = arith.constant dense<0.000000e+00> : vector<2x128xf32>
    %28 = tpu.matmul %27, %14, %cst_12 {dimension_numbers = #tpu.dot_dimension_numbers<[1], [0], [0], [1], [0, 0, 1, 1], [], []>} : vector<2x14xf32>, vector<14x128xf32>, vector<2x128xf32> -> vector<2x128xf32>
    %cst_13 = arith.constant dense<0.000000e+00> : vector<2xf32>
    %29 = vector.multi_reduction <add>, %28, %cst_13 [1] : vector<2x128xf32> to vector<2xf32>
    %30 = vector.shape_cast %29 : vector<2xf32> to vector<2x1xf32>
    %c0_14 = arith.constant 0 : index
    %c0_15 = arith.constant 0 : index
    %31 = vector.load %arg3[%c0_14, %c0_15] : memref<2x1xf32, #tpu.memory_space<vmem>>, vector<2x1xf32>
    tpu.vector_store %arg3[%c0_14, %c0_15], %30 {strides = array<i32>} : memref<2x1xf32, #tpu.memory_space<vmem>>, vector<2x1xf32>,
    return
  }
  func.func @transform_0(%arg0: i32) -> (i32, i32) {
    %c0_i32 = arith.constant 0 : i32
    %c0_i32_0 = arith.constant 0 : i32
    %c0_i32_1 = arith.constant 0 : i32
    return %c0_i32, %c0_i32_0 : i32, i32
  }
  func.func @transform_1(%arg0: i32) -> (i32, i32) {
    %c0_i32 = arith.constant 0 : i32
    %c0_i32_0 = arith.constant 0 : i32
    %c0_i32_1 = arith.constant 0 : i32
    return %c0_i32, %c0_i32_0 : i32, i32
  }
  func.func @transform_2(%arg0: i32) -> (i32, i32) {
    %c0_i32 = arith.constant 0 : i32
    %c0_i32_0 = arith.constant 0 : i32
    %c0_i32_1 = arith.constant 0 : i32
    return %c0_i32, %c0_i32_0 : i32, i32
  }
}

</mosaic_0001>

<llo_original>
// kernel: squeeze.0
$region0: #{squeeze.0}
  %s0 = inlined_call_operand.vmem [shape: f32[2,7], index: 0, kind: input, shape index: {}]
  %s1 = inlined_call_operand.vmem [shape: f32[14,1], index: 1, kind: output, shape index: {}]
  $region1: #{squeeze.0} parent=0
    #allocation0 [shape = 'u8[4096]{0}', space=vmem, size = 0x1000, scoped, tag = 'scoped mem for input reshape']
    %s3 = sshllo.u32 0, 2
    %v4 = vld [vmem:[%s0] sm:%s3]
    %5 = vst [vmem:[#allocation0] sm:%s3] %v4
    %v6 = vld [vmem:[#allocation0] sm:$0x3]
    %vm7 = vcmask 7168
    %8 = vst.msk [vmem:[%s1] ss:$7 sm:$0x3] %vm7, %v6
    %v9 = vld [vmem:[#allocation0] sm:$0x3]
    %10 = vrot.lane.b32.xlu0 %v9, 127
    %v11 = vpop.permute.xlu0 %10
    %vm12 = vcmask 7168
    %s13 = scalar_lea.vmem %s1, 1
    %14 = vst.msk [vmem:[%s13] ss:$7 sm:$0x3] %vm12, %v11
    %v15 = vld [vmem:[#allocation0] sm:$0x3]
    %16 = vrot.lane.b32.xlu0 %v15, 126
    %v17 = vpop.permute.xlu0 %16
    %vm18 = vcmask 7168
    %s19 = scalar_lea.vmem %s1, 2
    %20 = vst.msk [vmem:[%s19] ss:$7 sm:$0x3] %vm18, %v17
    %v21 = vld [vmem:[#allocation0] sm:$0x3]
    %22 = vrot.lane.b32.xlu0 %v21, 125
    %v23 = vpop.permute.xlu0 %22
    %vm24 = vcmask 7168
    %s25 = scalar_lea.vmem %s1, 3
    %26 = vst.msk [vmem:[%s25] ss:$7 sm:$0x3] %vm24, %v23
    %v27 = vld [vmem:[#allocation0] sm:$0x3]
    %28 = vrot.lane.b32.xlu0 %v27, 124
    %v29 = vpop.permute.xlu0 %28
    %vm30 = vcmask 7168
    %s31 = scalar_lea.vmem %s1, 4
    %32 = vst.msk [vmem:[%s31] ss:$7 sm:$0x3] %vm30, %v29
    %v33 = vld [vmem:[#allocation0] sm:$0x3]
    %34 = vrot.lane.b32.xlu0 %v33, 123
    %v35 = vpop.permute.xlu0 %34
    %vm36 = vcmask 7168
    %s37 = scalar_lea.vmem %s1, 5
    %38 = vst.msk [vmem:[%s37] ss:$7 sm:$0x3] %vm36, %v35
    %v39 = vld [vmem:[#allocation0] sm:$0x3]
    %40 = vrot.lane.b32.xlu0 %v39, 122
    %v41 = vpop.permute.xlu0 %40
    %vm42 = vcmask 7168
    %s43 = scalar_lea.vmem %s1, 6
    %44 = vst.msk [vmem:[%s43] ss:$7 sm:$0x3] %vm42, %v41

// kernel: critic_forward_pallas.1
$region0: #{critic_forward_pallas.1}
  #allocation0 [shape = 'u32[]', space=smem, size = 0x4, offset = 0x4, fixed_abs, tag = 'smem constant byte address 0x4 - core index']
  #allocation1 [shape = 'u32[144,128]{1,0:T(1,128)}', space=vmem, size = 0x12000, scoped, tag = 'internal scratch']
  %s0 = inlined_call_operand.vmem [shape: f32[14,128], index: 0, kind: input, shape index: {}]
  %s1 = inlined_call_operand.vmem [shape: f32[400,128], index: 1, kind: input, shape index: {}]
  %s2 = inlined_call_operand.vmem [shape: f32[2,1], index: 2, kind: output, shape index: {}]
  %s3 = sld [smem:[#allocation0]]
  $region18: #{critic_forward_pallas.1} parent=0
    _
  %s5 = ssub.s32 1, %s3
  %s6 = scalar_select 0, %s5, %s3
  // Predicated region
  $region2: #{critic_forward_pallas.1} parent=0 // pred_check
    _
  $region3: #{critic_forward_pallas.1} parent=0 // pred_check_branch
    %8 = sbr.rel (0) target = $region5
  $region4: #{critic_forward_pallas.1} parent=0 // pred_region
    _
  $region5: #{critic_forward_pallas.1} parent=0 // pred_fallthru
    _
  // Predicated region
  $region6: #{critic_forward_pallas.1} parent=0 // pred_check
    _
  $region7: #{critic_forward_pallas.1} parent=0 // pred_check_branch
    %10 = sbr.rel (0) target = $region9
  $region8: #{critic_forward_pallas.1} parent=0 // pred_region
    _
  $region9: #{critic_forward_pallas.1} parent=0 // pred_fallthru
    _
  %v11 = vld [vmem:[%s0] sm:$0xff]
  %v12 = vld [vmem:[%s0 + $0x8] sm:$0x3f]
  %v13 = vld [vmem:[%s1] sm:$0xff]
  %v14 = vld [vmem:[%s1 + $0x8] sm:$0xff]
  %v15 = vld [vmem:[%s1 + $0x10] sm:$0xff]
  %v16 = vld [vmem:[%s1 + $0x18] sm:$0xff]
  %v17 = vld [vmem:[%s1 + $0x20] sm:$0xff]
  %v18 = vld [vmem:[%s1 + $0x28] sm:$0xff]
  %v19 = vld [vmem:[%s1 + $0x30] sm:$0xff]
  %v20 = vld [vmem:[%s1 + $0x38] sm:$0xff]
  %v21 = vld [vmem:[%s1 + $0x40] sm:$0xff]
  %v22 = vld [vmem:[%s1 + $0x48] sm:$0xff]
  %v23 = vld [vmem:[%s1 + $0x50] sm:$0xff]
  %v24 = vld [vmem:[%s1 + $0x58] sm:$0xff]
  %v25 = vld [vmem:[%s1 + $0x60] sm:$0xff]
  %v26 = vld [vmem:[%s1 + $0x68] sm:$0xff]
  %v27 = vld [vmem:[%s1 + $0x70] sm:$0xff]
  %v28 = vld [vmem:[%s1 + $0x78] sm:$0xff]
  %29 = vmatprep.subr.mxu0 0.0
  %30 = vmatpush1.msra.mxu0 %v13
  %31 = vmatprep.subr.mxu0 0.0
  %32 = vmatpush1.msra.mxu0 %v14
  %33 = vmatprep.subr.mxu0 0.0
  %34 = vmatpush1.msra.mxu0 %v15
  %35 = vmatprep.subr.mxu0 0.0
  %36 = vmatpush1.msra.mxu0 %v16
  %37 = vmatprep.subr.mxu0 0.0
  %38 = vmatpush1.msra.mxu0 %v17
  %39 = vmatprep.subr.mxu0 0.0
  %40 = vmatpush1.msra.mxu0 %v18
  %41 = vmatprep.subr.mxu0 0.0
  %42 = vmatpush1.msra.mxu0 %v19
  %43 = vmatprep.subr.mxu0 0.0
  %44 = vmatpush1.msra.mxu0 %v20
  %45 = vmatprep.subr.mxu0 0.0
  %46 = vmatpush1.msra.mxu0 %v21
  %47 = vmatprep.subr.mxu0 0.0
  %48 = vmatpush1.msra.mxu0 %v22
  %49 = vmatprep.subr.mxu0 0.0
  %50 = vmatpush1.msra.mxu0 %v23
  %51 = vmatprep.subr.mxu0 0.0
  %52 = vmatpush1.msra.mxu0 %v24
  %53 = vmatprep.subr.mxu0 0.0
  %54 = vmatpush1.msra.mxu0 %v25
  %55 = vmatprep.subr.mxu0 0.0
  %56 = vmatpush1.msra.mxu0 %v26
  %57 = vmatprep.subr.mxu0 0.0
  %58 = vmatpush1.msra.mxu0 %v27
  %59 = vmatprep.subr.mxu0 0.0
  %60 = vmatpush1.msra.mxu0 %v28
  %61 = vmatprep.subr.mxu0 0.0
  %62 = vmatpush1.msra.mxu0 0.0
  %63 = vmatprep.subr.mxu0 0.0
  %64 = vmatpush1.msra.mxu0 0.0
  %65 = vmatprep.subr.mxu0 0.0
  %66 = vmatpush1.msra.mxu0 0.0
  %67 = vmatprep.subr.mxu0 0.0
  %68 = vmatpush1.msra.mxu0 0.0
  %69 = vmatprep.subr.mxu0 0.0
  %70 = vmatpush1.msra.mxu0 0.0
  %71 = vmatprep.subr.mxu0 0.0
  %72 = vmatpush1.msra.mxu0 0.0
  %73 = vmatprep.subr.mxu0 0.0
  %74 = vmatpush1.msra.mxu0 0.0
  %75 = vmatprep.subr.mxu0 0.0
  %76 = vmatpush1.msra.mxu0 0.0
  %77 = vmatprep.subr.mxu0 0.0
  %78 = vmatpush1.msra.mxu0 0.0
  %79 = vmatprep.subr.mxu0 0.0
  %80 = vmatpush1.msra.mxu0 0.0
  %81 = vmatprep.subr.mxu0 0.0
  %82 = vmatpush1.msra.mxu0 0.0
  %83 = vmatprep.subr.mxu0 0.0
  %84 = vmatpush1.msra.mxu0 0.0
  %85 = vmatprep.subr.mxu0 0.0
  %86 = vmatpush1.msra.mxu0 0.0
  %87 = vmatprep.subr.mxu0 0.0
  %88 = vmatpush1.msra.mxu0 0.0
  %89 = vmatprep.subr.mxu0 0.0
  %90 = vmatpush1.msra.mxu0 0.0
  %91 = vmatprep.subr.mxu0 0.0
  %92 = vmatpush1.msra.mxu0 0.0
  %93 = vmatprep.mubr.f32.mxu0 0.0
  %94 = vmatmul.mubr.f32.gmra.mrb[0].mxu0 %v11
  %v95 = vpop.f32.mrb[0].mxu0
  %v96 = vadd.f32 0.0, %v95
  %v97 = vpop.f32.mrb[0].mxu0
  %98 = vmatprep.mubr.f32.mxu0 0.0
  %99 = vmatmul.mubr.f32.gmra.mrb[0].mxu0 %v12
  %v100 = vpop.f32.mrb[0].mxu0
  %v101 = vadd.f32 0.0, %v100
  %v102 = vpop.f32.mrb[0].mxu0
  %103 = vdwg.mxu0
  %v104 = vmax.f32 %v96, 0.0
  %v105 = vmax.f32 %v101, 0.0
  %v106 = vld [vmem:[%s1 + $0x80] sm:$0xff]
  %v107 = vld [vmem:[%s1 + $0x88] sm:$0xff]
  %v108 = vld [vmem:[%s1 + $0x90] sm:$0xff]
  %v109 = vld [vmem:[%s1 + $0x98] sm:$0xff]
  %v110 = vld [vmem:[%s1 + $0xa0] sm:$0xff]
  %v111 = vld [vmem:[%s1 + $0xa8] sm:$0xff]
  %v112 = vld [vmem:[%s1 + $0xb0] sm:$0xff]
  %v113 = vld [vmem:[%s1 + $0xb8] sm:$0xff]
  %v114 = vld [vmem:[%s1 + $0xc0] sm:$0xff]
  %v115 = vld [vmem:[%s1 + $0xc8] sm:$0xff]
  %v116 = vld [vmem:[%s1 + $0xd0] sm:$0xff]
  %v117 = vld [vmem:[%s1 + $0xd8] sm:$0xff]
  %v118 = vld [vmem:[%s1 + $0xe0] sm:$0xff]
  %v119 = vld [vmem:[%s1 + $0xe8] sm:$0xff]
  %v120 = vld [vmem:[%s1 + $0xf0] sm:$0xff]
  %v121 = vld [vmem:[%s1 + $0xf8] sm:$0xff]
  %122 = vmatprep.subr.mxu0 0.0
  %123 = vmatpush1.msra.mxu0 %v106
  %124 = vmatprep.subr.mxu0 0.0
  %125 = vmatpush1.msra.mxu0 %v107
  %126 = vmatprep.subr.mxu0 0.0
  %127 = vmatpush1.msra.mxu0 %v108
  %128 = vmatprep.subr.mxu0 0.0
  %129 = vmatpush1.msra.mxu0 %v109
  %130 = vmatprep.subr.mxu0 0.0
  %131 = vmatpush1.msra.mxu0 %v110
  %132 = vmatprep.subr.mxu0 0.0
  %133 = vmatpush1.msra.mxu0 %v111
  %134 = vmatprep.subr.mxu0 0.0
  %135 = vmatpush1.msra.mxu0 %v112
  %136 = vmatprep.subr.mxu0 0.0
  %137 = vmatpush1.msra.mxu0 %v113
  %138 = vmatprep.subr.mxu0 0.0
  %139 = vmatpush1.msra.mxu0 %v114
  %140 = vmatprep.subr.mxu0 0.0
  %141 = vmatpush1.msra.mxu0 %v115
  %142 = vmatprep.subr.mxu0 0.0
  %143 = vmatpush1.msra.mxu0 %v116
  %144 = vmatprep.subr.mxu0 0.0
  %145 = vmatpush1.msra.mxu0 %v117
  %146 = vmatprep.subr.mxu0 0.0
  %147 = vmatpush1.msra.mxu0 %v118
  %148 = vmatprep.subr.mxu0 0.0
  %149 = vmatpush1.msra.mxu0 %v119
  %150 = vmatprep.subr.mxu0 0.0
  %151 = vmatpush1.msra.mxu0 %v120
  %152 = vmatprep.subr.mxu0 0.0
  %153 = vmatpush1.msra.mxu0 %v121
  %154 = vmatprep.subr.mxu0 0.0
  %155 = vmatpush1.msra.mxu0 0.0
  %156 = vmatprep.subr.mxu0 0.0
  %157 = vmatpush1.msra.mxu0 0.0
  %158 = vmatprep.subr.mxu0 0.0
  %159 = vmatpush1.msra.mxu0 0.0
  %160 = vmatprep.subr.mxu0 0.0
  %161 = vmatpush1.msra.mxu0 0.0
  %162 = vmatprep.subr.mxu0 0.0
  %163 = vmatpush1.msra.mxu0 0.0
  %164 = vmatprep.subr.mxu0 0.0
  %165 = vmatpush1.msra.mxu0 0.0
  %166 = vmatprep.subr.mxu0 0.0
  %167 = vmatpush1.msra.mxu0 0.0
  %168 = vmatprep.subr.mxu0 0.0
  %169 = vmatpush1.msra.mxu0 0.0
  %170 = vmatprep.subr.mxu0 0.0
  %171 = vmatpush1.msra.mxu0 0.0
  %172 = vmatprep.subr.mxu0 0.0
  %173 = vmatpush1.msra.mxu0 0.0
  %174 = vmatprep.subr.mxu0 0.0
  %175 = vmatpush1.msra.mxu0 0.0
  %176 = vmatprep.subr.mxu0 0.0
  %177 = vmatpush1.msra.mxu0 0.0
  %178 = vmatprep.subr.mxu0 0.0
  %179 = vmatpush1.msra.mxu0 0.0
  %180 = vmatprep.subr.mxu0 0.0
  %181 = vmatpush1.msra.mxu0 0.0
  %182 = vmatprep.subr.mxu0 0.0
  %183 = vmatpush1.msra.mxu0 0.0
  %184 = vmatprep.subr.mxu0 0.0
  %185 = vmatpush1.msra.mxu0 0.0
  %186 = vmatprep.mubr.f32.mxu0 0.0
  %187 = vmatmul.mubr.f32.gmra.mrb[0].mxu0 %v104
  %v188 = vpop.f32.mrb[0].mxu0
  %v189 = vadd.f32 0.0, %v188
  %v190 = vpop.f32.mrb[0].mxu0
  %191 = vmatprep.mubr.f32.mxu0 0.0
  %192 = vmatmul.mubr.f32.gmra.mrb[0].mxu0 %v105
  %v193 = vpop.f32.mrb[0].mxu0
  %v194 = vadd.f32 0.0, %v193
  %v195 = vpop.f32.mrb[0].mxu0
  %196 = vdwg.mxu0
  %v197 = vmax.f32 %v189, 0.0
  %v198 = vmax.f32 %v194, 0.0
  %v199 = vld [vmem:[%s1 + $0x100] sm:$0xff]
  %v200 = vld [vmem:[%s1 + $0x108] sm:$0xff]
  %v201 = vld [vmem:[%s1 + $0x110] sm:$0xff]
  %v202 = vld [vmem:[%s1 + $0x118] sm:$0xff]
  %v203 = vld [vmem:[%s1 + $0x120] sm:$0xff]
  %v204 = vld [vmem:[%s1 + $0x128] sm:$0xff]
  %v205 = vld [vmem:[%s1 + $0x130] sm:$0xff]
  %v206 = vld [vmem:[%s1 + $0x138] sm:$0xff]
  %v207 = vld [vmem:[%s1 + $0x140] sm:$0xff]
  %v208 = vld [vmem:[%s1 + $0x148] sm:$0xff]
  %v209 = vld [vmem:[%s1 + $0x150] sm:$0xff]
  %v210 = vld [vmem:[%s1 + $0x158] sm:$0xff]
  %v211 = vld [vmem:[%s1 + $0x160] sm:$0xff]
  %v212 = vld [vmem:[%s1 + $0x168] sm:$0xff]
  %v213 = vld [vmem:[%s1 + $0x170] sm:$0xff]
  %v214 = vld [vmem:[%s1 + $0x178] sm:$0xff]
  %215 = vmatprep.subr.mxu0 0.0
  %216 = vmatpush1.msra.mxu0 %v199
  %217 = vmatprep.subr.mxu0 0.0
  %218 = vmatpush1.msra.mxu0 %v200
  %219 = vmatprep.subr.mxu0 0.0
  %220 = vmatpush1.msra.mxu0 %v201
  %221 = vmatprep.subr.mxu0 0.0
  %222 = vmatpush1.msra.mxu0 %v202
  %223 = vmatprep.subr.mxu0 0.0
  %224 = vmatpush1.msra.mxu0 %v203
  %225 = vmatprep.subr.mxu0 0.0
  %226 = vmatpush1.msra.mxu0 %v204
  %227 = vmatprep.subr.mxu0 0.0
  %228 = vmatpush1.msra.mxu0 %v205
  %229 = vmatprep.subr.mxu0 0.0
  %230 = vmatpush1.msra.mxu0 %v206
  %231 = vmatprep.subr.mxu0 0.0
  %232 = vmatpush1.msra.mxu0 %v207
  %233 = vmatprep.subr.mxu0 0.0
  %234 = vmatpush1.msra.mxu0 %v208
  %235 = vmatprep.subr.mxu0 0.0
  %236 = vmatpush1.msra.mxu0 %v209
  %237 = vmatprep.subr.mxu0 0.0
  %238 = vmatpush1.msra.mxu0 %v210
  %239 = vmatprep.subr.mxu0 0.0
  %240 = vmatpush1.msra.mxu0 %v211
  %241 = vmatprep.subr.mxu0 0.0
  %242 = vmatpush1.msra.mxu0 %v212
  %243 = vmatprep.subr.mxu0 0.0
  %244 = vmatpush1.msra.mxu0 %v213
  %245 = vmatprep.subr.mxu0 0.0
  %246 = vmatpush1.msra.mxu0 %v214
  %247 = vmatprep.subr.mxu0 0.0
  %248 = vmatpush1.msra.mxu0 0.0
  %249 = vmatprep.subr.mxu0 0.0
  %250 = vmatpush1.msra.mxu0 0.0
  %251 = vmatprep.subr.mxu0 0.0
  %252 = vmatpush1.msra.mxu0 0.0
  %253 = vmatprep.subr.mxu0 0.0
  %254 = vmatpush1.msra.mxu0 0.0
  %255 = vmatprep.subr.mxu0 0.0
  %256 = vmatpush1.msra.mxu0 0.0
  %257 = vmatprep.subr.mxu0 0.0
  %258 = vmatpush1.msra.mxu0 0.0
  %259 = vmatprep.subr.mxu0 0.0
  %260 = vmatpush1.msra.mxu0 0.0
  %261 = vmatprep.subr.mxu0 0.0
  %262 = vmatpush1.msra.mxu0 0.0
  %263 = vmatprep.subr.mxu0 0.0
  %264 = vmatpush1.msra.mxu0 0.0
  %265 = vmatprep.subr.mxu0 0.0
  %266 = vmatpush1.msra.mxu0 0.0
  %267 = vmatprep.subr.mxu0 0.0
  %268 = vmatpush1.msra.mxu0 0.0
  %269 = vmatprep.subr.mxu0 0.0
  %270 = vmatpush1.msra.mxu0 0.0
  %271 = vmatprep.subr.mxu0 0.0
  %272 = vmatpush1.msra.mxu0 0.0
  %273 = vmatprep.subr.mxu0 0.0
  %274 = vmatpush1.msra.mxu0 0.0
  %275 = vmatprep.subr.mxu0 0.0
  %276 = vmatpush1.msra.mxu0 0.0
  %277 = vmatprep.subr.mxu0 0.0
  %278 = vmatpush1.msra.mxu0 0.0
  %279 = vmatprep.mubr.f32.mxu0 0.0
  %280 = vmatmul.mubr.f32.gmra.mrb[0].mxu0 %v197
  %v281 = vpop.f32.mrb[0].mxu0
  %v282 = vadd.f32 0.0, %v281
  %v283 = vpop.f32.mrb[0].mxu0
  %284 = vmatprep.mubr.f32.mxu0 0.0
  %285 = vmatmul.mubr.f32.gmra.mrb[0].mxu0 %v198
  %v286 = vpop.f32.mrb[0].mxu0
  %v287 = vadd.f32 0.0, %v286
  %v288 = vpop.f32.mrb[0].mxu0
  %289 = vdwg.mxu0
  %v290 = vld [vmem:[%s1 + $0x180] sm:$0xff]
  %v291 = vld [vmem:[%s1 + $0x188] sm:$0x3f]
  %v292 = vmax.f32 %v282, 0.0
  %v293 = vmax.f32 %v287, 0.0
  %v294 = vmul.f32 %v292, %v290
  %v295 = vmul.f32 %v293, %v291
  %v296 = vlaneseq
  %v297 = vand.u32 %v296, 127
  %v298 = vlaneseq
  %v299 = vshrl.u32 %v298, 7
  %v300 = vmul.u32 %v299, 7
  %vm301 = vcmp.ge.s32.totalorder %v297, %v300
  %v302 = vadd.s32 %v299, 1
  %v303 = vmul.u32 %v302, 7
  %vm304 = vcmp.lt.s32.totalorder %v297, %v303
  %vm305 = vmand %vm301, %vm304
  %v306 = vsel %vm305, 1, 0
  %v307 = vcvt.s32.f32 %v306
  %vm308 = vcmask 113664
  %v310 = vsel %vm308, %v307, 0
  %vm312 = vcmask 1045504
  %v314 = vsel %vm312, %v295, 0
  %316 = vmatprep.subr.mxu0 0.0
  %317 = vmatpush1.msra.mxu0 %v294
  %318 = vmatprep.subr.mxu0 0.0
  %319 = vmatpush1.msra.mxu0 %v314
  %320 = vmatprep.subr.mxu0 0.0
  %321 = vmatpush1.msra.mxu0 0.0
  %322 = vmatprep.subr.mxu0 0.0
  %323 = vmatpush1.msra.mxu0 0.0
  %324 = vmatprep.subr.mxu0 0.0
  %325 = vmatpush1.msra.mxu0 0.0
  %326 = vmatprep.subr.mxu0 0.0
  %327 = vmatpush1.msra.mxu0 0.0
  %328 = vmatprep.subr.mxu0 0.0
  %329 = vmatpush1.msra.mxu0 0.0
  %330 = vmatprep.subr.mxu0 0.0
  %331 = vmatpush1.msra.mxu0 0.0
  %332 = vmatprep.subr.mxu0 0.0
  %333 = vmatpush1.msra.mxu0 0.0
  %334 = vmatprep.subr.mxu0 0.0
  %335 = vmatpush1.msra.mxu0 0.0
  %336 = vmatprep.subr.mxu0 0.0
  %337 = vmatpush1.msra.mxu0 0.0
  %338 = vmatprep.subr.mxu0 0.0
  %339 = vmatpush1.msra.mxu0 0.0
  %340 = vmatprep.subr.mxu0 0.0
  %341 = vmatpush1.msra.mxu0 0.0
  %342 = vmatprep.subr.mxu0 0.0
  %343 = vmatpush1.msra.mxu0 0.0
  %344 = vmatprep.subr.mxu0 0.0
  %345 = vmatpush1.msra.mxu0 0.0
  %346 = vmatprep.subr.mxu0 0.0
  %347 = vmatpush1.msra.mxu0 0.0
  %348 = vmatprep.subr.mxu0 0.0
  %349 = vmatpush1.msra.mxu0 0.0
  %350 = vmatprep.subr.mxu0 0.0
  %351 = vmatpush1.msra.mxu0 0.0
  %352 = vmatprep.subr.mxu0 0.0
  %353 = vmatpush1.msra.mxu0 0.0
  %354 = vmatprep.subr.mxu0 0.0
  %355 = vmatpush1.msra.mxu0 0.0
  %356 = vmatprep.subr.mxu0 0.0
  %357 = vmatpush1.msra.mxu0 0.0
  %358 = vmatprep.subr.mxu0 0.0
  %359 = vmatpush1.msra.mxu0 0.0
  %360 = vmatprep.subr.mxu0 0.0
  %361 = vmatpush1.msra.mxu0 0.0
  %362 = vmatprep.subr.mxu0 0.0
  %363 = vmatpush1.msra.mxu0 0.0
  %364 = vmatprep.subr.mxu0 0.0
  %365 = vmatpush1.msra.mxu0 0.0
  %366 = vmatprep.subr.mxu0 0.0
  %367 = vmatpush1.msra.mxu0 0.0
  %368 = vmatprep.subr.mxu0 0.0
  %369 = vmatpush1.msra.mxu0 0.0
  %370 = vmatprep.subr.mxu0 0.0
  %371 = vmatpush1.msra.mxu0 0.0
  %372 = vmatprep.subr.mxu0 0.0
  %373 = vmatpush1.msra.mxu0 0.0
  %374 = vmatprep.subr.mxu0 0.0
  %375 = vmatpush1.msra.mxu0 0.0
  %376 = vmatprep.subr.mxu0 0.0
  %377 = vmatpush1.msra.mxu0 0.0
  %378 = vmatprep.subr.mxu0 0.0
  %379 = vmatpush1.msra.mxu0 0.0
  %380 = vmatprep.mubr.f32.mxu0 0.0
  %381 = vmatmul.mubr.f32.gmra.mrb[0].mxu0 %v310
  %v382 = vpop.f32.mrb[0].mxu0
  %v383 = vadd.f32 0.0, %v382
  %v384 = vpop.f32.mrb[0].mxu0
  %385 = vdwg.mxu0
  %vm386 = vcmask 1041408
  %v387 = vsel %vm386, %v383, 0.0
  %388 = vadd.xlane.f32.xlu0 %v387
  %v389 = vpop.xlane.xlu0 %388
  %vm390 = vcmask 1024
  %391 = vst.msk [vmem:[%s2] sm:$0x3] %vm390, %v389
  // Predicated region
  $region10: #{critic_forward_pallas.1} parent=0 // pred_check
    _
  $region11: #{critic_forward_pallas.1} parent=0 // pred_check_branch
    %393 = sbr.rel (0) target = $region13
  $region12: #{critic_forward_pallas.1} parent=0 // pred_region
    _
  $region13: #{critic_forward_pallas.1} parent=0 // pred_fallthru
    _
  // Predicated region
  $region14: #{critic_forward_pallas.1} parent=0 // pred_check
    _
  $region15: #{critic_forward_pallas.1} parent=0 // pred_check_branch
    %395 = sbr.rel (0) target = $region17
  $region16: #{critic_forward_pallas.1} parent=0 // pred_region
    _
  $region17: #{critic_forward_pallas.1} parent=0 // pred_fallthru
    _

</llo_original>
